<compile_context>
chip_gen: v6e
topology: v6e:2x2x1
jax: 0.10.0
libtpu: 0.0.40
codegen_flags: <defaults>
</compile_context>

<pallas_src>
import jax
import jax.numpy as jnp
from jax.experimental import pallas as pl
from jax.experimental.pallas import tpu as pltpu

INPUT_DIM = 784          # fixed by x.view(-1, 784) in the PyTorch forward
INPUT_PAD = 896          # 7 * 128  (lane-dense padding of the 784 axis)
HIDDEN_DIM = 128
LATENT_DIM = 32
BATCH = 8


def _vae_fwd_kernel(x_ref, eps_ref,
                    w1_ref, b1_ref,
                    w2_ref, b2_ref,
                    w3_ref, b3_ref,
                    w4_ref, b4_ref,
                    recon_ref, mulogvar_ref):
    # ---- encode: fc1 -> relu  (bf16 matmul, f32 accumulate) ----
    h1 = jnp.dot(x_ref[...], w1_ref[...],
                 preferred_element_type=jnp.float32) + b1_ref[...]
    h1 = jnp.maximum(h1, 0.0)                                          # [TB, H] f32

    # ---- fused fc21 / fc22 -> packed [TB, 2L] (mu | logvar) ----
    ml = jnp.dot(h1.astype(jnp.bfloat16), w2_ref[...],
                 preferred_element_type=jnp.float32) + b2_ref[...]
    mu = ml[:, :LATENT_DIM]
    logvar = ml[:, LATENT_DIM:]

    # ---- reparameterize: z = mu + eps * exp(0.5 * logvar)  (f32) ----
    z = mu + eps_ref[...] * jnp.exp(0.5 * logvar)                      # [TB, L]

    # ---- decode: fc3 -> relu -> fc4 -> sigmoid ----
    h3 = jnp.dot(z.astype(jnp.bfloat16), w3_ref[...],
                 preferred_element_type=jnp.float32) + b3_ref[...]
    h3 = jnp.maximum(h3, 0.0)
    logits = jnp.dot(h3.astype(jnp.bfloat16), w4_ref[...],
                     preferred_element_type=jnp.float32) + b4_ref[...]

    recon_ref[...] = jax.nn.sigmoid(logits)                            # [TB, 896]
    mulogvar_ref[...] = ml                                             # [TB, 2L]


def init_params(key):
    """Raw per-layer params matching the nn.Linear layers; weights pre-transposed
    to [in, out] so y = x @ W + b equals torch's x @ W.T + b; biases as [1, out]."""
    ks = jax.random.split(key, 10)
    scale = 0.02

    def lin(kw, kb, din, dout):
        w = scale * jax.random.normal(kw, (din, dout), jnp.float32)
        bias = scale * jax.random.normal(kb, (1, dout), jnp.float32)
        return w, bias

    w1, b1 = lin(ks[0], ks[1], INPUT_DIM, HIDDEN_DIM)      # fc1
    w21, b21 = lin(ks[2], ks[3], HIDDEN_DIM, LATENT_DIM)   # fc21
    w22, b22 = lin(ks[4], ks[5], HIDDEN_DIM, LATENT_DIM)   # fc22
    w3, b3 = lin(ks[6], ks[7], LATENT_DIM, HIDDEN_DIM)     # fc3
    w4, b4 = lin(ks[8], ks[9], HIDDEN_DIM, INPUT_DIM)      # fc4
    return (w1, b1, w21, b21, w22, b22, w3, b3, w4, b4)


def prepare_params(raw):
    """One-time prep: fuse fc21/fc22, zero-pad the 784 axis to 896, cast weights to bf16.
    Zero-filled pad rows of w1 / pad cols of w4+b4 keep the math identical."""
    (w1, b1, w21, b21, w22, b22, w3, b3, w4, b4) = raw

    w1p = jnp.zeros((INPUT_PAD, HIDDEN_DIM), jnp.float32).at[:INPUT_DIM].set(w1)
    w2 = jnp.concatenate([w21, w22], axis=1)                       # [H, 2L]
    b2 = jnp.concatenate([b21, b22], axis=1)                       # [1, 2L]
    w4p = jnp.zeros((HIDDEN_DIM, INPUT_PAD), jnp.float32).at[:, :INPUT_DIM].set(w4)
    b4p = jnp.zeros((1, INPUT_PAD), jnp.float32).at[:, :INPUT_DIM].set(b4)

    bf = jnp.bfloat16
    return (w1p.astype(bf), b1,
            w2.astype(bf), b2,
            w3.astype(bf), b3,
            w4p.astype(bf), b4p)


@jax.jit
def vae_forward(x, eps, kparams):
    """x: NCHW tensor whose trailing dims flatten to 784 (e.g. [B,1,28,28]).
    eps: [B, LATENT_DIM] standard-normal noise (torch.randn_like equivalent).
    Returns (recon [B,784], mu [B,L], logvar [B,L])."""
    b = x.shape[0]
    x_flat = x.reshape(b, INPUT_DIM)

    # Batch tile: 128 rows once batches are large enough, otherwise a multiple of 8.
    tile_b = 128 if b >= 128 else max(8, -(-b // 8) * 8)
    b_pad = -(-b // tile_b) * tile_b

    x_p = jnp.zeros((b_pad, INPUT_PAD), jnp.bfloat16)
    x_p = x_p.at[:b, :INPUT_DIM].set(x_flat.astype(jnp.bfloat16))
    eps_p = jnp.zeros((b_pad, LATENT_DIM), jnp.float32).at[:b].set(eps.astype(jnp.float32))

    (w1, b1, w2, b2, w3, b3, w4, b4) = kparams

    def batch_spec(shape):
        return pl.BlockSpec(shape, lambda i: (i, 0))

    def resident(shape):                      # weights/biases stay in VMEM across grid steps
        return pl.BlockSpec(shape, lambda i: (0, 0))

    recon_p, ml_p = pl.pallas_call(
        _vae_fwd_kernel,
        out_shape=(
            jax.ShapeDtypeStruct((b_pad, INPUT_PAD), jnp.float32),
            jax.ShapeDtypeStruct((b_pad, 2 * LATENT_DIM), jnp.float32),
        ),
        grid=(b_pad // tile_b,),
        in_specs=[
            batch_spec((tile_b, INPUT_PAD)),
            batch_spec((tile_b, LATENT_DIM)),
            resident((INPUT_PAD, HIDDEN_DIM)), resident((1, HIDDEN_DIM)),
            resident((HIDDEN_DIM, 2 * LATENT_DIM)), resident((1, 2 * LATENT_DIM)),
            resident((LATENT_DIM, HIDDEN_DIM)), resident((1, HIDDEN_DIM)),
            resident((HIDDEN_DIM, INPUT_PAD)), resident((1, INPUT_PAD)),
        ],
        out_specs=(
            batch_spec((tile_b, INPUT_PAD)),
            batch_spec((tile_b, 2 * LATENT_DIM)),
        ),
        compiler_params=pltpu.CompilerParams(
            dimension_semantics=("parallel",)),
    )(x_p, eps_p, w1, b1, w2, b2, w3, b3, w4, b4)

    recon = recon_p[:b, :INPUT_DIM]
    mu = ml_p[:b, :LATENT_DIM]
    logvar = ml_p[:b, LATENT_DIM:]
    return recon, mu, logvar


def vae_reference(x, eps, kparams):
    """Pure-JAX reference applying the same bf16 casts as the kernel."""
    (w1, b1, w2, b2, w3, b3, w4, b4) = kparams
    b = x.shape[0]
    xf = x.reshape(b, INPUT_DIM).astype(jnp.bfloat16)
    xp = jnp.zeros((b, INPUT_PAD), jnp.bfloat16).at[:, :INPUT_DIM].set(xf)
    h1 = jnp.maximum(jnp.dot(xp, w1, preferred_element_type=jnp.float32) + b1, 0.0)
    ml = jnp.dot(h1.astype(jnp.bfloat16), w2, preferred_element_type=jnp.float32) + b2
    mu, logvar = ml[:, :LATENT_DIM], ml[:, LATENT_DIM:]
    z = mu + eps * jnp.exp(0.5 * logvar)
    h3 = jnp.maximum(jnp.dot(z.astype(jnp.bfloat16), w3,
                             preferred_element_type=jnp.float32) + b3, 0.0)
    logits = jnp.dot(h3.astype(jnp.bfloat16), w4,
                     preferred_element_type=jnp.float32) + b4
    return jax.nn.sigmoid(logits)[:, :INPUT_DIM], mu, logvar


if __name__ == "__main__":
    key = jax.random.PRNGKey(0)
    k_x, k_eps, k_param = jax.random.split(key, 3)

    # MNIST-like NCHW input: [B, 1, 28, 28] -> flattens to [B, 784]
    x = jax.random.normal(k_x, (BATCH, 1, 28, 28), jnp.float32)
    # TODO(synk): torch.randn_like(std) is replaced by an explicit eps input
    # (could instead use pltpu.prng_seed / prng_random_bits inside the kernel).
    eps = jax.random.normal(k_eps, (BATCH, LATENT_DIM), jnp.float32)

    kparams = prepare_params(init_params(k_param))

    recon, mu, logvar = vae_forward(x, eps, kparams)
    jax.block_until_ready((recon, mu, logvar))

    assert recon.shape == (BATCH, INPUT_DIM)
    assert mu.shape == (BATCH, LATENT_DIM)
    assert logvar.shape == (BATCH, LATENT_DIM)

    r_ref, mu_ref, lv_ref = vae_reference(x, eps, kparams)
    assert jnp.allclose(recon, r_ref, atol=2e-2, rtol=2e-2)
    assert jnp.allclose(mu, mu_ref, atol=2e-2, rtol=2e-2)
    assert jnp.allclose(logvar, lv_ref, atol=2e-2, rtol=2e-2)

    print("KERNEL_OK")
</pallas_src>

<mosaic_0001>
module attributes {stable_mosaic.version = 11 : i64} {
  func.func @_vae_fwd_kernel(%arg0: i32, %arg1: memref<8x896xbf16, #tpu.memory_space<vmem>>, %arg2: memref<8x32xf32, #tpu.memory_space<vmem>>, %arg3: memref<896x128xbf16, #tpu.memory_space<vmem>>, %arg4: memref<1x128xf32, #tpu.memory_space<vmem>>, %arg5: memref<128x64xbf16, #tpu.memory_space<vmem>>, %arg6: memref<1x64xf32, #tpu.memory_space<vmem>>, %arg7: memref<32x128xbf16, #tpu.memory_space<vmem>>, %arg8: memref<1x128xf32, #tpu.memory_space<vmem>>, %arg9: memref<128x896xbf16, #tpu.memory_space<vmem>>, %arg10: memref<1x896xf32, #tpu.memory_space<vmem>>, %arg11: memref<8x896xf32, #tpu.memory_space<vmem>>, %arg12: memref<8x64xf32, #tpu.memory_space<vmem>>) attributes {dimension_semantics = [#tpu.dimension_semantics<parallel>], iteration_bounds = array<i64: 1>, scalar_prefetch = 0 : i64, scratch_operands = 0 : i64, tpu.core_type = #tpu.core_type<tc>, window_params = [{transform_indices = @transform_0, window_bounds = array<i64: 8, 896>}, {transform_indices = @transform_1, window_bounds = array<i64: 8, 32>}, {pipeline_mode = #tpu.pipeline_mode<synchronous>, transform_indices = @transform_2, window_bounds = array<i64: 896, 128>}, {pipeline_mode = #tpu.pipeline_mode<synchronous>, transform_indices = @transform_3, window_bounds = array<i64: 1, 128>}, {pipeline_mode = #tpu.pipeline_mode<synchronous>, transform_indices = @transform_4, window_bounds = array<i64: 128, 64>}, {pipeline_mode = #tpu.pipeline_mode<synchronous>, transform_indices = @transform_5, window_bounds = array<i64: 1, 64>}, {pipeline_mode = #tpu.pipeline_mode<synchronous>, transform_indices = @transform_6, window_bounds = array<i64: 32, 128>}, {pipeline_mode = #tpu.pipeline_mode<synchronous>, transform_indices = @transform_7, window_bounds = array<i64: 1, 128>}, {pipeline_mode = #tpu.pipeline_mode<synchronous>, transform_indices = @transform_8, window_bounds = array<i64: 128, 896>}, {pipeline_mode = #tpu.pipeline_mode<synchronous>, transform_indices = @transform_9, window_bounds = array<i64: 1, 896>}, {transform_indices = @transform_10, window_bounds = array<i64: 8, 896>}, {transform_indices = @transform_11, window_bounds = array<i64: 8, 64>}]} {
    %c0 = arith.constant 0 : index
    %c0_0 = arith.constant 0 : index
    %0 = vector.load %arg1[%c0, %c0_0] : memref<8x896xbf16, #tpu.memory_space<vmem>>, vector<8x896xbf16>
    %c0_1 = arith.constant 0 : index
    %c0_2 = arith.constant 0 : index
    %1 = vector.load %arg3[%c0_1, %c0_2] : memref<896x128xbf16, #tpu.memory_space<vmem>>, vector<896x128xbf16>
    %cst = arith.constant dense<0.000000e+00> : vector<8x128xf32>
    %2 = tpu.matmul %0, %1, %cst {dimension_numbers = #tpu.dot_dimension_numbers<[1], [0], [0], [1], [0, 0, 1, 1], [], []>} : vector<8x896xbf16>, vector<896x128xbf16>, vector<8x128xf32> -> vector<8x128xf32>
    %c0_3 = arith.constant 0 : index
    %c0_4 = arith.constant 0 : index
    %3 = vector.load %arg4[%c0_3, %c0_4] : memref<1x128xf32, #tpu.memory_space<vmem>>, vector<1x128xf32>
    %4 = vector.broadcast %3 : vector<1x128xf32> to vector<8x128xf32>
    %5 = arith.addf %2, %4 : vector<8x128xf32>
    %cst_5 = arith.constant 0.000000e+00 : f32
    %6 = vector.broadcast %cst_5 : f32 to vector<8x128xf32>
    %7 = arith.maximumf %5, %6 : vector<8x128xf32>
    %8 = arith.truncf %7 : vector<8x128xf32> to vector<8x128xbf16>
    %c0_6 = arith.constant 0 : index
    %c0_7 = arith.constant 0 : index
    %9 = vector.load %arg5[%c0_6, %c0_7] : memref<128x64xbf16, #tpu.memory_space<vmem>>, vector<128x64xbf16>
    %cst_8 = arith.constant dense<0.000000e+00> : vector<8x64xf32>
    %10 = tpu.matmul %8, %9, %cst_8 {dimension_numbers = #tpu.dot_dimension_numbers<[1], [0], [0], [1], [0, 0, 1, 1], [], []>} : vector<8x128xbf16>, vector<128x64xbf16>, vector<8x64xf32> -> vector<8x64xf32>
    %c0_9 = arith.constant 0 : index
    %c0_10 = arith.constant 0 : index
    %11 = vector.load %arg6[%c0_9, %c0_10] : memref<1x64xf32, #tpu.memory_space<vmem>>, vector<1x64xf32>
    %12 = vector.broadcast %11 : vector<1x64xf32> to vector<8x64xf32>
    %13 = arith.addf %10, %12 : vector<8x64xf32>
    %14 = vector.extract_strided_slice %13 {offsets = [0, 0], sizes = [8, 32], strides = [1, 1]} : vector<8x64xf32> to vector<8x32xf32>
    %15 = vector.extract_strided_slice %13 {offsets = [0, 32], sizes = [8, 32], strides = [1, 1]} : vector<8x64xf32> to vector<8x32xf32>
    %c0_11 = arith.constant 0 : index
    %c0_12 = arith.constant 0 : index
    %16 = vector.load %arg2[%c0_11, %c0_12] : memref<8x32xf32, #tpu.memory_space<vmem>>, vector<8x32xf32>
    %cst_13 = arith.constant 5.000000e-01 : f32
    %17 = vector.broadcast %cst_13 : f32 to vector<8x32xf32>
    %18 = arith.mulf %17, %15 : vector<8x32xf32>
    %19 = math.exp %18 : vector<8x32xf32>
    %20 = arith.mulf %16, %19 : vector<8x32xf32>
    %21 = arith.addf %14, %20 : vector<8x32xf32>
    %22 = arith.truncf %21 : vector<8x32xf32> to vector<8x32xbf16>
    %c0_14 = arith.constant 0 : index
    %c0_15 = arith.constant 0 : index
    %23 = vector.load %arg7[%c0_14, %c0_15] : memref<32x128xbf16, #tpu.memory_space<vmem>>, vector<32x128xbf16>
    %cst_16 = arith.constant dense<0.000000e+00> : vector<8x128xf32>
    %24 = tpu.matmul %22, %23, %cst_16 {dimension_numbers = #tpu.dot_dimension_numbers<[1], [0], [0], [1], [0, 0, 1, 1], [], []>} : vector<8x32xbf16>, vector<32x128xbf16>, vector<8x128xf32> -> vector<8x128xf32>
    %c0_17 = arith.constant 0 : index
    %c0_18 = arith.constant 0 : index
    %25 = vector.load %arg8[%c0_17, %c0_18] : memref<1x128xf32, #tpu.memory_space<vmem>>, vector<1x128xf32>
    %26 = vector.broadcast %25 : vector<1x128xf32> to vector<8x128xf32>
    %27 = arith.addf %24, %26 : vector<8x128xf32>
    %cst_19 = arith.constant 0.000000e+00 : f32
    %28 = vector.broadcast %cst_19 : f32 to vector<8x128xf32>
    %29 = arith.maximumf %27, %28 : vector<8x128xf32>
    %30 = arith.truncf %29 : vector<8x128xf32> to vector<8x128xbf16>
    %c0_20 = arith.constant 0 : index
    %c0_21 = arith.constant 0 : index
    %31 = vector.load %arg9[%c0_20, %c0_21] : memref<128x896xbf16, #tpu.memory_space<vmem>>, vector<128x896xbf16>
    %cst_22 = arith.constant dense<0.000000e+00> : vector<8x896xf32>
    %32 = tpu.matmul %30, %31, %cst_22 {dimension_numbers = #tpu.dot_dimension_numbers<[1], [0], [0], [1], [0, 0, 1, 1], [], []>} : vector<8x128xbf16>, vector<128x896xbf16>, vector<8x896xf32> -> vector<8x896xf32>
    %c0_23 = arith.constant 0 : index
    %c0_24 = arith.constant 0 : index
    %33 = vector.load %arg10[%c0_23, %c0_24] : memref<1x896xf32, #tpu.memory_space<vmem>>, vector<1x896xf32>
    %34 = vector.broadcast %33 : vector<1x896xf32> to vector<8x896xf32>
    %35 = arith.addf %32, %34 : vector<8x896xf32>
    %36 = arith.negf %35 : vector<8x896xf32>
    %37 = math.exp %36 : vector<8x896xf32>
    %cst_25 = arith.constant 1.000000e+00 : f32
    %38 = vector.broadcast %cst_25 : f32 to vector<8x896xf32>
    %39 = arith.addf %38, %37 : vector<8x896xf32>
    %40 = arith.divf %38, %39 : vector<8x896xf32>
    %c0_26 = arith.constant 0 : index
    %c0_27 = arith.constant 0 : index
    %41 = vector.load %arg11[%c0_26, %c0_27] : memref<8x896xf32, #tpu.memory_space<vmem>>, vector<8x896xf32>
    tpu.vector_store %arg11[%c0_26, %c0_27], %40 {strides = array<i32>} : memref<8x896xf32, #tpu.memory_space<vmem>>, vector<8x896xf32>,
    %c0_28 = arith.constant 0 : index
    %c0_29 = arith.constant 0 : index
    %42 = vector.load %arg12[%c0_28, %c0_29] : memref<8x64xf32, #tpu.memory_space<vmem>>, vector<8x64xf32>
    tpu.vector_store %arg12[%c0_28, %c0_29], %13 {strides = array<i32>} : memref<8x64xf32, #tpu.memory_space<vmem>>, vector<8x64xf32>,
    return
  }
  func.func @transform_0(%arg0: i32) -> (i32, i32) {
    %c0_i32 = arith.constant 0 : i32
    %c0_i32_0 = arith.constant 0 : i32
    return %arg0, %c0_i32 : i32, i32
  }
  func.func @transform_1(%arg0: i32) -> (i32, i32) {
    %c0_i32 = arith.constant 0 : i32
    %c0_i32_0 = arith.constant 0 : i32
    return %arg0, %c0_i32 : i32, i32
  }
  func.func @transform_2(%arg0: i32) -> (i32, i32) {
    %c0_i32 = arith.constant 0 : i32
    %c0_i32_0 = arith.constant 0 : i32
    %c0_i32_1 = arith.constant 0 : i32
    return %c0_i32, %c0_i32_0 : i32, i32
  }
  func.func @transform_3(%arg0: i32) -> (i32, i32) {
    %c0_i32 = arith.constant 0 : i32
    %c0_i32_0 = arith.constant 0 : i32
    %c0_i32_1 = arith.constant 0 : i32
    return %c0_i32, %c0_i32_0 : i32, i32
  }
  func.func @transform_4(%arg0: i32) -> (i32, i32) {
    %c0_i32 = arith.constant 0 : i32
    %c0_i32_0 = arith.constant 0 : i32
    %c0_i32_1 = arith.constant 0 : i32
    return %c0_i32, %c0_i32_0 : i32, i32
  }
  func.func @transform_5(%arg0: i32) -> (i32, i32) {
    %c0_i32 = arith.constant 0 : i32
    %c0_i32_0 = arith.constant 0 : i32
    %c0_i32_1 = arith.constant 0 : i32
    return %c0_i32, %c0_i32_0 : i32, i32
  }
  func.func @transform_6(%arg0: i32) -> (i32, i32) {
    %c0_i32 = arith.constant 0 : i32
    %c0_i32_0 = arith.constant 0 : i32
    %c0_i32_1 = arith.constant 0 : i32
    return %c0_i32, %c0_i32_0 : i32, i32
  }
  func.func @transform_7(%arg0: i32) -> (i32, i32) {
    %c0_i32 = arith.constant 0 : i32
    %c0_i32_0 = arith.constant 0 : i32
    %c0_i32_1 = arith.constant 0 : i32
    return %c0_i32, %c0_i32_0 : i32, i32
  }
  func.func @transform_8(%arg0: i32) -> (i32, i32) {
    %c0_i32 = arith.constant 0 : i32
    %c0_i32_0 = arith.constant 0 : i32
    %c0_i32_1 = arith.constant 0 : i32
    return %c0_i32, %c0_i32_0 : i32, i32
  }
  func.func @transform_9(%arg0: i32) -> (i32, i32) {
    %c0_i32 = arith.constant 0 : i32
    %c0_i32_0 = arith.constant 0 : i32
    %c0_i32_1 = arith.constant 0 : i32
    return %c0_i32, %c0_i32_0 : i32, i32
  }
  func.func @transform_10(%arg0: i32) -> (i32, i32) {
    %c0_i32 = arith.constant 0 : i32
    %c0_i32_0 = arith.constant 0 : i32
    return %arg0, %c0_i32 : i32, i32
  }
  func.func @transform_11(%arg0: i32) -> (i32, i32) {
    %c0_i32 = arith.constant 0 : i32
    %c0_i32_0 = arith.constant 0 : i32
    return %arg0, %c0_i32 : i32, i32
  }
}

</mosaic_0001>

<llo_original>
// kernel: vae_forward.1
$region0: #{vae_forward.1}
  #allocation0 [shape = 'u32[]', space=smem, size = 0x4, offset = 0x4, fixed_abs, tag = 'smem constant byte address 0x4 - core index']
  #allocation1 [shape = 'u32[144,128]{1,0:T(1,128)}', space=vmem, size = 0x12000, scoped, tag = 'internal scratch']
  %s0 = inlined_call_operand.vmem [shape: bf16[8,896], index: 0, kind: input, shape index: {}]
  %s1 = inlined_call_operand.vmem [shape: f32[8,32], index: 1, kind: input, shape index: {}]
  %s2 = inlined_call_operand.vmem [shape: bf16[896,128], index: 2, kind: input, shape index: {}]
  %s3 = inlined_call_operand.vmem [shape: f32[1,128], index: 3, kind: input, shape index: {}]
  %s4 = inlined_call_operand.vmem [shape: bf16[128,64], index: 4, kind: input, shape index: {}]
  %s5 = inlined_call_operand.vmem [shape: f32[1,64], index: 5, kind: input, shape index: {}]
  %s6 = inlined_call_operand.vmem [shape: bf16[32,128], index: 6, kind: input, shape index: {}]
  %s7 = inlined_call_operand.vmem [shape: f32[1,128], index: 7, kind: input, shape index: {}]
  %s8 = inlined_call_operand.hbm [shape: bf16[128,896], index: 8, kind: input, shape index: {}]
  %s9 = inlined_call_operand.vmem [shape: f32[1,896], index: 9, kind: input, shape index: {}]
  %s10 = inlined_call_operand.hbm [shape: f32[8,896], index: 10, kind: output, shape index: {0}]
  %s11 = inlined_call_operand.vmem [shape: f32[8,64], index: 11, kind: output, shape index: {1}]
  %12 = xla_tuple %s10, %s11
  %s13 = sld [smem:[#allocation0]]
  $region62: #{vae_forward.1} parent=0
    _
  %s15 = ssub.s32 1, %s13
  %s16 = scalar_select 0, %s15, %s13
  $region1: #{vae_forward.1} parent=0
    #allocation2 [shape = 'u8[229376]{0}', space=vmem, size = 0x38000, scoped, tag = 'input window, operand 8, single buffered']
    #allocation3 [shape = 's32[1]{0}', space=sflag, size = 0x4, scoped, tag = 'scoped memory for vae_forward.1']
    #allocation4 [shape = 's32[1]{0}', space=sflag, size = 0x4, scoped, tag = 'scoped memory for vae_forward.1']
    #allocation5 [shape = 'u8[28672]{0}', space=vmem, size = 0x7000, scoped, tag = 'output window, operand 0, single buffered']
    %17 = vsyncpa [#allocation3], 0
    %18 = vsyncpa [#allocation4], 0
    // Predicated region
    $region2: #{vae_forward.1} parent=1 // pred_check
      _
    $region3: #{vae_forward.1} parent=1 // pred_check_branch
      %20 = sbr.rel (0) target = $region5
    $region4: #{vae_forward.1} parent=1 // pred_region
      _
    $region5: #{vae_forward.1} parent=1 // pred_fallthru
      _
    // Predicated region
    $region6: #{vae_forward.1} parent=1 // pred_check
      _
    $region7: #{vae_forward.1} parent=1 // pred_check_branch
      %22 = sbr.rel (0) target = $region9
    $region8: #{vae_forward.1} parent=1 // pred_region
      _
    $region9: #{vae_forward.1} parent=1 // pred_fallthru
      _
    // Predicated region
    $region10: #{vae_forward.1} parent=1 // pred_check
      _
    $region11: #{vae_forward.1} parent=1 // pred_check_branch
      %24 = sbr.rel (0) target = $region13
    $region12: #{vae_forward.1} parent=1 // pred_region
      _
    $region13: #{vae_forward.1} parent=1 // pred_fallthru
      _
    // Predicated region
    $region14: #{vae_forward.1} parent=1 // pred_check
      _
    $region15: #{vae_forward.1} parent=1 // pred_check_branch
      %26 = sbr.rel (0) target = $region17
    $region16: #{vae_forward.1} parent=1 // pred_region
      _
    $region17: #{vae_forward.1} parent=1 // pred_fallthru
      _
    // Predicated region
    $region18: #{vae_forward.1} parent=1 // pred_check
      _
    $region19: #{vae_forward.1} parent=1 // pred_check_branch
      %28 = sbr.rel (0) target = $region21
    $region20: #{vae_forward.1} parent=1 // pred_region
      _
    $region21: #{vae_forward.1} parent=1 // pred_fallthru
      _
    // Predicated region
    $region22: #{vae_forward.1} parent=1 // pred_check
      _
    $region23: #{vae_forward.1} parent=1 // pred_check_branch
      %30 = sbr.rel (0) target = $region25
    $region24: #{vae_forward.1} parent=1 // pred_region
      _
    $region25: #{vae_forward.1} parent=1 // pred_fallthru
      _
    // Predicated region
    $region26: #{vae_forward.1} parent=1 // pred_check
      _
    $region27: #{vae_forward.1} parent=1 // pred_check_branch
      %32 = sbr.rel (0) target = $region29
    $region28: #{vae_forward.1} parent=1 // pred_region
      _
    $region29: #{vae_forward.1} parent=1 // pred_fallthru
      _
    // Predicated region
    $region30: #{vae_forward.1} parent=1 // pred_check
      _
    $region31: #{vae_forward.1} parent=1 // pred_check_branch
      %34 = sbr.rel (0) target = $region33
    $region32: #{vae_forward.1} parent=1 // pred_region
      _
    $region33: #{vae_forward.1} parent=1 // pred_fallthru
      _
    // Predicated region
    $region34: #{vae_forward.1} parent=1 // pred_check
      _
    $region35: #{vae_forward.1} parent=1 // pred_check_branch
      %36 = sbr.rel (0) target = $region37
    $region36: #{vae_forward.1} parent=1 // pred_region
      %s38 = ssub.s32 7168, 7168
      %39 = vsyncadd [#allocation3], %s38
      %s40 = sshll.u32 [#allocation2], 4
      %s41 = int_to_ptr.vmem [resolvable:$true] %s40
      %46 = dma.hbm_to_vmem [thread:$0]  %s8, 7168, %s41, [#allocation3], 448, 448, 28
    $region37: #{vae_forward.1} parent=1 // pred_fallthru
      _
    // Predicated region
    $region38: #{vae_forward.1} parent=1 // pred_check
      _
    $region39: #{vae_forward.1} parent=1 // pred_check_branch
      %48 = sbr.rel (0) target = $region41
    $region40: #{vae_forward.1} parent=1 // pred_region
      _
    $region41: #{vae_forward.1} parent=1 // pred_fallthru
      _
    // Predicated region
    $region42: #{vae_forward.1} parent=1 // pred_check
      _
    $region43: #{vae_forward.1} parent=1 // pred_check_branch
      %50 = sbr.rel (0) target = $region45
    $region44: #{vae_forward.1} parent=1 // pred_region
      %51 = dma.done [#allocation3], 7168
    $region45: #{vae_forward.1} parent=1 // pred_fallthru
      _
    %v53 = vld [vmem:[%s0] sm:$0xff]
    %v54 = vld [vmem:[%s0 + $0x8] sm:$0xff]
    %v55 = vld [vmem:[%s0 + $0x10] sm:$0xff]
    %v56 = vld [vmem:[%s0 + $0x18] sm:$0xf]
    %v57 = vld [vmem:[%s2] sm:$0xf]
    %v58 = vld [vmem:[%s2 + $0x4] sm:$0xf]
    %v59 = vld [vmem:[%s2 + $0x8] sm:$0xf]
    %v60 = vld [vmem:[%s2 + $0xc] sm:$0xf]
    %v61 = vld [vmem:[%s2 + $0x10] sm:$0xf]
    %v62 = vld [vmem:[%s2 + $0x14] sm:$0xf]
    %v63 = vld [vmem:[%s2 + $0x18] sm:$0xf]
    %v64 = vld [vmem:[%s2 + $0x1c] sm:$0xf]
    %v65 = vld [vmem:[%s2 + $0x20] sm:$0xf]
    %v66 = vld [vmem:[%s2 + $0x24] sm:$0xf]
    %v67 = vld [vmem:[%s2 + $0x28] sm:$0xf]
    %v68 = vld [vmem:[%s2 + $0x2c] sm:$0xf]
    %v69 = vld [vmem:[%s2 + $0x30] sm:$0xf]
    %v70 = vld [vmem:[%s2 + $0x34] sm:$0xf]
    %v71 = vld [vmem:[%s2 + $0x38] sm:$0xf]
    %v72 = vld [vmem:[%s2 + $0x3c] sm:$0xf]
    %v73 = vld [vmem:[%s2 + $0x40] sm:$0xf]
    %v74 = vld [vmem:[%s2 + $0x44] sm:$0xf]
    %v75 = vld [vmem:[%s2 + $0x48] sm:$0xf]
    %v76 = vld [vmem:[%s2 + $0x4c] sm:$0xf]
    %v77 = vld [vmem:[%s2 + $0x50] sm:$0xf]
    %v78 = vld [vmem:[%s2 + $0x54] sm:$0xf]
    %v79 = vld [vmem:[%s2 + $0x58] sm:$0xf]
    %v80 = vld [vmem:[%s2 + $0x5c] sm:$0xf]
    %v81 = vld [vmem:[%s2 + $0x60] sm:$0xf]
    %v82 = vld [vmem:[%s2 + $0x64] sm:$0xf]
    %v83 = vld [vmem:[%s2 + $0x68] sm:$0xf]
    %v84 = vld [vmem:[%s2 + $0x6c] sm:$0xf]
    %v85 = vld [vmem:[%s2 + $0x70] sm:$0xf]
    %v86 = vld [vmem:[%s2 + $0x74] sm:$0xf]
    %v87 = vld [vmem:[%s2 + $0x78] sm:$0xf]
    %v88 = vld [vmem:[%s2 + $0x7c] sm:$0xf]
    %v89 = vld [vmem:[%s2 + $0x80] sm:$0xf]
    %v90 = vld [vmem:[%s2 + $0x84] sm:$0xf]
    %v91 = vld [vmem:[%s2 + $0x88] sm:$0xf]
    %v92 = vld [vmem:[%s2 + $0x8c] sm:$0xf]
    %v93 = vld [vmem:[%s2 + $0x90] sm:$0xf]
    %v94 = vld [vmem:[%s2 + $0x94] sm:$0xf]
    %v95 = vld [vmem:[%s2 + $0x98] sm:$0xf]
    %v96 = vld [vmem:[%s2 + $0x9c] sm:$0xf]
    %v97 = vld [vmem:[%s2 + $0xa0] sm:$0xf]
    %v98 = vld [vmem:[%s2 + $0xa4] sm:$0xf]
    %v99 = vld [vmem:[%s2 + $0xa8] sm:$0xf]
    %v100 = vld [vmem:[%s2 + $0xac] sm:$0xf]
    %v101 = vld [vmem:[%s2 + $0xb0] sm:$0xf]
    %v102 = vld [vmem:[%s2 + $0xb4] sm:$0xf]
    %v103 = vld [vmem:[%s2 + $0xb8] sm:$0xf]
    %v104 = vld [vmem:[%s2 + $0xbc] sm:$0xf]
    %v105 = vld [vmem:[%s2 + $0xc0] sm:$0xf]
    %v106 = vld [vmem:[%s2 + $0xc4] sm:$0xf]
    %v107 = vld [vmem:[%s2 + $0xc8] sm:$0xf]
    %v108 = vld [vmem:[%s2 + $0xcc] sm:$0xf]
    %v109 = vld [vmem:[%s2 + $0xd0] sm:$0xf]
    %v110 = vld [vmem:[%s2 + $0xd4] sm:$0xf]
    %v111 = vld [vmem:[%s2 + $0xd8] sm:$0xf]
    %v112 = vld [vmem:[%s2 + $0xdc] sm:$0xf]
    %v113 = vld [vmem:[%s2 + $0xe0] sm:$0xf]
    %v114 = vld [vmem:[%s2 + $0xe4] sm:$0xf]
    %v115 = vld [vmem:[%s2 + $0xe8] sm:$0xf]
    %v116 = vld [vmem:[%s2 + $0xec] sm:$0xf]
    %v117 = vld [vmem:[%s2 + $0xf0] sm:$0xf]
    %v118 = vld [vmem:[%s2 + $0xf4] sm:$0xf]
    %v119 = vld [vmem:[%s2 + $0xf8] sm:$0xf]
    %v120 = vld [vmem:[%s2 + $0xfc] sm:$0xf]
    %v121 = vld [vmem:[%s2 + $0x100] sm:$0xf]
    %v122 = vld [vmem:[%s2 + $0x104] sm:$0xf]
    %v123 = vld [vmem:[%s2 + $0x108] sm:$0xf]
    %v124 = vld [vmem:[%s2 + $0x10c] sm:$0xf]
    %v125 = vld [vmem:[%s2 + $0x110] sm:$0xf]
    %v126 = vld [vmem:[%s2 + $0x114] sm:$0xf]
    %v127 = vld [vmem:[%s2 + $0x118] sm:$0xf]
    %v128 = vld [vmem:[%s2 + $0x11c] sm:$0xf]
    %v129 = vld [vmem:[%s2 + $0x120] sm:$0xf]
    %v130 = vld [vmem:[%s2 + $0x124] sm:$0xf]
    %v131 = vld [vmem:[%s2 + $0x128] sm:$0xf]
    %v132 = vld [vmem:[%s2 + $0x12c] sm:$0xf]
    %v133 = vld [vmem:[%s2 + $0x130] sm:$0xf]
    %v134 = vld [vmem:[%s2 + $0x134] sm:$0xf]
    %v135 = vld [vmem:[%s2 + $0x138] sm:$0xf]
    %v136 = vld [vmem:[%s2 + $0x13c] sm:$0xf]
    %v137 = vld [vmem:[%s2 + $0x140] sm:$0xf]
    %v138 = vld [vmem:[%s2 + $0x144] sm:$0xf]
    %v139 = vld [vmem:[%s2 + $0x148] sm:$0xf]
    %v140 = vld [vmem:[%s2 + $0x14c] sm:$0xf]
    %v141 = vld [vmem:[%s2 + $0x150] sm:$0xf]
    %v142 = vld [vmem:[%s2 + $0x154] sm:$0xf]
    %v143 = vld [vmem:[%s2 + $0x158] sm:$0xf]
    %v144 = vld [vmem:[%s2 + $0x15c] sm:$0xf]
    %v145 = vld [vmem:[%s2 + $0x160] sm:$0xf]
    %v146 = vld [vmem:[%s2 + $0x164] sm:$0xf]
    %v147 = vld [vmem:[%s2 + $0x168] sm:$0xf]
    %v148 = vld [vmem:[%s2 + $0x16c] sm:$0xf]
    %v149 = vld [vmem:[%s2 + $0x170] sm:$0xf]
    %v150 = vld [vmem:[%s2 + $0x174] sm:$0xf]
    %v151 = vld [vmem:[%s2 + $0x178] sm:$0xf]
    %v152 = vld [vmem:[%s2 + $0x17c] sm:$0xf]
    %v153 = vld [vmem:[%s2 + $0x180] sm:$0xf]
    %v154 = vld [vmem:[%s2 + $0x184] sm:$0xf]
    %v155 = vld [vmem:[%s2 + $0x188] sm:$0xf]
    %v156 = vld [vmem:[%s2 + $0x18c] sm:$0xf]
    %v157 = vld [vmem:[%s2 + $0x190] sm:$0xf]
    %v158 = vld [vmem:[%s2 + $0x194] sm:$0xf]
    %v159 = vld [vmem:[%s2 + $0x198] sm:$0xf]
    %v160 = vld [vmem:[%s2 + $0x19c] sm:$0xf]
    %v161 = vld [vmem:[%s2 + $0x1a0] sm:$0xf]
    %v162 = vld [vmem:[%s2 + $0x1a4] sm:$0xf]
    %v163 = vld [vmem:[%s2 + $0x1a8] sm:$0xf]
    %v164 = vld [vmem:[%s2 + $0x1ac] sm:$0xf]
    %v165 = vld [vmem:[%s2 + $0x1b0] sm:$0xf]
    %v166 = vld [vmem:[%s2 + $0x1b4] sm:$0xf]
    %v167 = vld [vmem:[%s2 + $0x1b8] sm:$0xf]
    %v168 = vld [vmem:[%s2 + $0x1bc] sm:$0xf]
    %v169 = vld [vmem:[%s3] sm:$0x1]
    %v171 = vlaneseq
    %v172 = vshrl.u32 %v171, 7
    %v173 = vsub.s32 0, %v172
    %v174 = vrot.slane %v169, %v173
    %v180 = vunpack.c.l.b16 %v53
    %v181 = vunpack.c.h.b16 %v53
    %v182 = vunpack.c.l.b16 %v54
    %v183 = vunpack.c.h.b16 %v54
    %v184 = vunpack.c.l.b16 %v55
    %v185 = vunpack.c.h.b16 %v55
    %v186 = vunpack.c.l.b16 %v56
    %v187 = vpack.c.b16 %v180, %v180
    %v188 = vpack.c.b16 %v181, %v181
    %v189 = vpack.c.b16 %v182, %v182
    %v190 = vpack.c.b16 %v183, %v183
    %v191 = vpack.c.b16 %v184, %v184
    %v192 = vpack.c.b16 %v185, %v185
    %v193 = vpack.c.b16 %v186, %v186
    %v313 = vunpack.c.l.b16 %v57
    %v314 = vunpack.c.l.b16 %v58
    %v315 = vunpack.c.l.b16 %v59
    %v316 = vunpack.c.l.b16 %v60
    %v317 = vunpack.c.l.b16 %v61
    %v318 = vunpack.c.l.b16 %v62
    %v319 = vunpack.c.l.b16 %v63
    %v320 = vunpack.c.l.b16 %v64
    %v321 = vunpack.c.l.b16 %v65
    %v322 = vunpack.c.l.b16 %v66
    %v323 = vunpack.c.l.b16 %v67
    %v324 = vunpack.c.l.b16 %v68
    %v325 = vunpack.c.l.b16 %v69
    %v326 = vunpack.c.l.b16 %v70
    %v327 = vunpack.c.l.b16 %v71
    %v328 = vunpack.c.l.b16 %v72
    %v329 = vunpack.c.l.b16 %v73
    %v330 = vunpack.c.l.b16 %v74
    %v331 = vunpack.c.l.b16 %v75
    %v332 = vunpack.c.l.b16 %v76
    %v333 = vunpack.c.l.b16 %v77
    %v334 = vunpack.c.l.b16 %v78
    %v335 = vunpack.c.l.b16 %v79
    %v336 = vunpack.c.l.b16 %v80
    %v337 = vunpack.c.l.b16 %v81
    %v338 = vunpack.c.l.b16 %v82
    %v339 = vunpack.c.l.b16 %v83
    %v340 = vunpack.c.l.b16 %v84
    %v341 = vunpack.c.l.b16 %v85
    %v342 = vunpack.c.l.b16 %v86
    %v343 = vunpack.c.l.b16 %v87
    %v344 = vunpack.c.l.b16 %v88
    %v345 = vunpack.c.l.b16 %v89
    %v346 = vunpack.c.l.b16 %v90
    %v347 = vunpack.c.l.b16 %v91
    %v348 = vunpack.c.l.b16 %v92
    %v349 = vunpack.c.l.b16 %v93
    %v350 = vunpack.c.l.b16 %v94
    %v351 = vunpack.c.l.b16 %v95
    %v352 = vunpack.c.l.b16 %v96
    %v353 = vunpack.c.l.b16 %v97
    %v354 = vunpack.c.l.b16 %v98
    %v355 = vunpack.c.l.b16 %v99
    %v356 = vunpack.c.l.b16 %v100
    %v357 = vunpack.c.l.b16 %v101
    %v358 = vunpack.c.l.b16 %v102
    %v359 = vunpack.c.l.b16 %v103
    %v360 = vunpack.c.l.b16 %v104
    %v361 = vunpack.c.l.b16 %v105
    %v362 = vunpack.c.l.b16 %v106
    %v363 = vunpack.c.l.b16 %v107
    %v364 = vunpack.c.l.b16 %v108
    %v365 = vunpack.c.l.b16 %v109
    %v366 = vunpack.c.l.b16 %v110
    %v367 = vunpack.c.l.b16 %v111
    %v368 = vunpack.c.l.b16 %v112
    %v369 = vunpack.c.l.b16 %v113
    %v370 = vunpack.c.l.b16 %v114
    %v371 = vunpack.c.l.b16 %v115
    %v372 = vunpack.c.l.b16 %v116
    %v373 = vunpack.c.l.b16 %v117
    %v374 = vunpack.c.l.b16 %v118
    %v375 = vunpack.c.l.b16 %v119
    %v376 = vunpack.c.l.b16 %v120
    %v377 = vunpack.c.l.b16 %v121
    %v378 = vunpack.c.l.b16 %v122
    %v379 = vunpack.c.l.b16 %v123
    %v380 = vunpack.c.l.b16 %v124
    %v381 = vunpack.c.l.b16 %v125
    %v382 = vunpack.c.l.b16 %v126
    %v383 = vunpack.c.l.b16 %v127
    %v384 = vunpack.c.l.b16 %v128
    %v385 = vunpack.c.l.b16 %v129
    %v386 = vunpack.c.l.b16 %v130
    %v387 = vunpack.c.l.b16 %v131
    %v388 = vunpack.c.l.b16 %v132
    %v389 = vunpack.c.l.b16 %v133
    %v390 = vunpack.c.l.b16 %v134
    %v391 = vunpack.c.l.b16 %v135
    %v392 = vunpack.c.l.b16 %v136
    %v393 = vunpack.c.l.b16 %v137
    %v394 = vunpack.c.l.b16 %v138
    %v395 = vunpack.c.l.b16 %v139
    %v396 = vunpack.c.l.b16 %v140
    %v397 = vunpack.c.l.b16 %v141
    %v398 = vunpack.c.l.b16 %v142
    %v399 = vunpack.c.l.b16 %v143
    %v400 = vunpack.c.l.b16 %v144
    %v401 = vunpack.c.l.b16 %v145
    %v402 = vunpack.c.l.b16 %v146
    %v403 = vunpack.c.l.b16 %v147
    %v404 = vunpack.c.l.b16 %v148
    %v405 = vunpack.c.l.b16 %v149
    %v406 = vunpack.c.l.b16 %v150
    %v407 = vunpack.c.l.b16 %v151
    %v408 = vunpack.c.l.b16 %v152
    %v409 = vunpack.c.l.b16 %v153
    %v410 = vunpack.c.l.b16 %v154
    %v411 = vunpack.c.l.b16 %v155
    %v412 = vunpack.c.l.b16 %v156
    %v413 = vunpack.c.l.b16 %v157
    %v414 = vunpack.c.l.b16 %v158
    %v415 = vunpack.c.l.b16 %v159
    %v416 = vunpack.c.l.b16 %v160
    %v417 = vunpack.c.l.b16 %v161
    %v418 = vunpack.c.l.b16 %v162
    %v419 = vunpack.c.l.b16 %v163
    %v420 = vunpack.c.l.b16 %v164
    %v421 = vunpack.c.l.b16 %v165
    %v422 = vunpack.c.l.b16 %v166
    %v423 = vunpack.c.l.b16 %v167
    %v424 = vunpack.c.l.b16 %v168
    %v425 = vpack.c.b16 %v314, %v313
    %v426 = vpack.c.b16 %v316, %v315
    %v427 = vpack.c.b16 %v318, %v317
    %v428 = vpack.c.b16 %v320, %v319
    %v429 = vpack.c.b16 %v322, %v321
    %v430 = vpack.c.b16 %v324, %v323
    %v431 = vpack.c.b16 %v326, %v325
    %v432 = vpack.c.b16 %v328, %v327
    %v433 = vpack.c.b16 %v330, %v329
    %v434 = vpack.c.b16 %v332, %v331
    %v435 = vpack.c.b16 %v334, %v333
    %v436 = vpack.c.b16 %v336, %v335
    %v437 = vpack.c.b16 %v338, %v337
    %v438 = vpack.c.b16 %v340, %v339
    %v439 = vpack.c.b16 %v342, %v341
    %v440 = vpack.c.b16 %v344, %v343
    %v441 = vpack.c.b16 %v346, %v345
    %v442 = vpack.c.b16 %v348, %v347
    %v443 = vpack.c.b16 %v350, %v349
    %v444 = vpack.c.b16 %v352, %v351
    %v445 = vpack.c.b16 %v354, %v353
    %v446 = vpack.c.b16 %v356, %v355
    %v447 = vpack.c.b16 %v358, %v357
    %v448 = vpack.c.b16 %v360, %v359
    %v449 = vpack.c.b16 %v362, %v361
    %v450 = vpack.c.b16 %v364, %v363
    %v451 = vpack.c.b16 %v366, %v365
    %v452 = vpack.c.b16 %v368, %v367
    %v453 = vpack.c.b16 %v370, %v369
    %v454 = vpack.c.b16 %v372, %v371
    %v455 = vpack.c.b16 %v374, %v373
    %v456 = vpack.c.b16 %v376, %v375
    %v457 = vpack.c.b16 %v378, %v377
    %v458 = vpack.c.b16 %v380, %v379
    %v459 = vpack.c.b16 %v382, %v381
    %v460 = vpack.c.b16 %v384, %v383
    %v461 = vpack.c.b16 %v386, %v385
    %v462 = vpack.c.b16 %v388, %v387
    %v463 = vpack.c.b16 %v390, %v389
    %v464 = vpack.c.b16 %v392, %v391
    %v465 = vpack.c.b16 %v394, %v393
    %v466 = vpack.c.b16 %v396, %v395
    %v467 = vpack.c.b16 %v398, %v397
    %v468 = vpack.c.b16 %v400, %v399
    %v469 = vpack.c.b16 %v402, %v401
    %v470 = vpack.c.b16 %v404, %v403
    %v471 = vpack.c.b16 %v406, %v405
    %v472 = vpack.c.b16 %v408, %v407
    %v473 = vpack.c.b16 %v410, %v409
    %v474 = vpack.c.b16 %v412, %v411
    %v475 = vpack.c.b16 %v414, %v413
    %v476 = vpack.c.b16 %v416, %v415
    %v477 = vpack.c.b16 %v418, %v417
    %v478 = vpack.c.b16 %v420, %v419
    %v479 = vpack.c.b16 %v422, %v421
    %v480 = vpack.c.b16 %v424, %v423
    %537 = vmatprep.subr.bf16.mxu0 0
    %538 = vmatpush1.bf16.msra.mxu0 %v432
    %539 = vmatprep.subr.bf16.mxu0 0
    %540 = vmatpush1.bf16.msra.mxu0 %v431
    %541 = vmatprep.subr.bf16.mxu0 0
    %542 = vmatpush1.bf16.msra.mxu0 %v430
    %543 = vmatprep.subr.bf16.mxu0 0
    %544 = vmatpush1.bf16.msra.mxu0 %v429
    %545 = vmatprep.subr.bf16.mxu0 0
    %546 = vmatpush1.bf16.msra.mxu0 %v428
    %547 = vmatprep.subr.bf16.mxu0 0
    %548 = vmatpush1.bf16.msra.mxu0 %v427
    %549 = vmatprep.subr.bf16.mxu0 0
    %550 = vmatpush1.bf16.msra.mxu0 %v426
    %551 = vmatprep.subr.bf16.mxu0 0
    %552 = vmatpush1.bf16.msra.mxu0 %v425
    %553 = vmatprep.subr.bf16.mxu0 0
    %554 = vmatpush2.bf16.msra.mxu0 %v440
    %555 = vmatprep.subr.bf16.mxu0 0
    %556 = vmatpush2.bf16.msra.mxu0 %v439
    %557 = vmatprep.subr.bf16.mxu0 0
    %558 = vmatpush2.bf16.msra.mxu0 %v438
    %559 = vmatprep.subr.bf16.mxu0 0
    %560 = vmatpush2.bf16.msra.mxu0 %v437
    %561 = vmatprep.subr.bf16.mxu0 0
    %562 = vmatpush2.bf16.msra.mxu0 %v436
    %563 = vmatprep.subr.bf16.mxu0 0
    %564 = vmatpush2.bf16.msra.mxu0 %v435
    %565 = vmatprep.subr.bf16.mxu0 0
    %566 = vmatpush2.bf16.msra.mxu0 %v434
    %567 = vmatprep.subr.bf16.mxu0 0
    %568 = vmatpush2.bf16.msra.mxu0 %v433
    %569 = vmatprep.mubr.bf16.mxu0 %v188
    %570 = vmatmul.mubr.bf16.gmra.mxu0 %v187
    %v571 = vpop.f32.mrf.mxu0
    %v572 = vadd.f32 %v174, %v571
    %v573 = vpop.f32.mrf.mxu0
    %v574 = vpop.f32.mrf.mxu0
    %v575 = vpop.f32.mrf.mxu0
    %576 = vdwg.mxu0
    %577 = vmatprep.subr.bf16.mxu0 0
    %578 = vmatpush1.bf16.msra.mxu0 %v448
    %579 = vmatprep.subr.bf16.mxu0 0
    %580 = vmatpush1.bf16.msra.mxu0 %v447
    %581 = vmatprep.subr.bf16.mxu0 0
    %582 = vmatpush1.bf16.msra.mxu0 %v446
    %583 = vmatprep.subr.bf16.mxu0 0
    %584 = vmatpush1.bf16.msra.mxu0 %v445
    %585 = vmatprep.subr.bf16.mxu0 0
    %586 = vmatpush1.bf16.msra.mxu0 %v444
    %587 = vmatprep.subr.bf16.mxu0 0
    %588 = vmatpush1.bf16.msra.mxu0 %v443
    %589 = vmatprep.subr.bf16.mxu0 0
    %590 = vmatpush1.bf16.msra.mxu0 %v442
    %591 = vmatprep.subr.bf16.mxu0 0
    %592 = vmatpush1.bf16.msra.mxu0 %v441
    %593 = vmatprep.subr.bf16.mxu0 0
    %594 = vmatpush2.bf16.msra.mxu0 %v456
    %595 = vmatprep.subr.bf16.mxu0 0
    %596 = vmatpush2.bf16.msra.mxu0 %v455
    %597 = vmatprep.subr.bf16.mxu0 0
    %598 = vmatpush2.bf16.msra.mxu0 %v454
    %599 = vmatprep.subr.bf16.mxu0 0
    %600 = vmatpush2.bf16.msra.mxu0 %v453
    %601 = vmatprep.subr.bf16.mxu0 0
    %602 = vmatpush2.bf16.msra.mxu0 %v452
    %603 = vmatprep.subr.bf16.mxu0 0
    %604 = vmatpush2.bf16.msra.mxu0 %v451
    %605 = vmatprep.subr.bf16.mxu0 0
    %606 = vmatpush2.bf16.msra.mxu0 %v450
    %607 = vmatprep.subr.bf16.mxu0 0
    %608 = vmatpush2.bf16.msra.mxu0 %v449
    %609 = vmatprep.mubr.bf16.mxu0 %v190
    %610 = vmatmul.mubr.bf16.gmra.mxu0 %v189
    %v611 = vpop.f32.mrf.mxu0
    %v612 = vadd.f32 %v572, %v611
    %v613 = vpop.f32.mrf.mxu0
    %v614 = vpop.f32.mrf.mxu0
    %v615 = vpop.f32.mrf.mxu0
    %616 = vdwg.mxu0
    %617 = vmatprep.subr.bf16.mxu0 0
    %618 = vmatpush1.bf16.msra.mxu0 %v464
    %619 = vmatprep.subr.bf16.mxu0 0
    %620 = vmatpush1.bf16.msra.mxu0 %v463
    %621 = vmatprep.subr.bf16.mxu0 0
    %622 = vmatpush1.bf16.msra.mxu0 %v462
    %623 = vmatprep.subr.bf16.mxu0 0
    %624 = vmatpush1.bf16.msra.mxu0 %v461
    %625 = vmatprep.subr.bf16.mxu0 0
    %626 = vmatpush1.bf16.msra.mxu0 %v460
    %627 = vmatprep.subr.bf16.mxu0 0
    %628 = vmatpush1.bf16.msra.mxu0 %v459
    %629 = vmatprep.subr.bf16.mxu0 0
    %630 = vmatpush1.bf16.msra.mxu0 %v458
    %631 = vmatprep.subr.bf16.mxu0 0
    %632 = vmatpush1.bf16.msra.mxu0 %v457
    %633 = vmatprep.subr.bf16.mxu0 0
    %634 = vmatpush2.bf16.msra.mxu0 %v472
    %635 = vmatprep.subr.bf16.mxu0 0
    %636 = vmatpush2.bf16.msra.mxu0 %v471
    %637 = vmatprep.subr.bf16.mxu0 0
    %638 = vmatpush2.bf16.msra.mxu0 %v470
    %639 = vmatprep.subr.bf16.mxu0 0
    %640 = vmatpush2.bf16.msra.mxu0 %v469
    %641 = vmatprep.subr.bf16.mxu0 0
    %642 = vmatpush2.bf16.msra.mxu0 %v468
    %643 = vmatprep.subr.bf16.mxu0 0
    %644 = vmatpush2.bf16.msra.mxu0 %v467
    %645 = vmatprep.subr.bf16.mxu0 0
    %646 = vmatpush2.bf16.msra.mxu0 %v466
    %647 = vmatprep.subr.bf16.mxu0 0
    %648 = vmatpush2.bf16.msra.mxu0 %v465
    %649 = vmatprep.mubr.bf16.mxu0 %v192
    %650 = vmatmul.mubr.bf16.gmra.mxu0 %v191
    %v651 = vpop.f32.mrf.mxu0
    %v652 = vadd.f32 %v612, %v651
    %v653 = vpop.f32.mrf.mxu0
    %v654 = vpop.f32.mrf.mxu0
    %v655 = vpop.f32.mrf.mxu0
    %656 = vdwg.mxu0
    %657 = vmatprep.subr.bf16.mxu0 0
    %658 = vmatpush1.bf16.msra.mxu0 %v480
    %659 = vmatprep.subr.bf16.mxu0 0
    %660 = vmatpush1.bf16.msra.mxu0 %v479
    %661 = vmatprep.subr.bf16.mxu0 0
    %662 = vmatpush1.bf16.msra.mxu0 %v478
    %663 = vmatprep.subr.bf16.mxu0 0
    %664 = vmatpush1.bf16.msra.mxu0 %v477
    %665 = vmatprep.subr.bf16.mxu0 0
    %666 = vmatpush1.bf16.msra.mxu0 %v476
    %667 = vmatprep.subr.bf16.mxu0 0
    %668 = vmatpush1.bf16.msra.mxu0 %v475
    %669 = vmatprep.subr.bf16.mxu0 0
    %670 = vmatpush1.bf16.msra.mxu0 %v474
    %671 = vmatprep.subr.bf16.mxu0 0
    %672 = vmatpush1.bf16.msra.mxu0 %v473
    %673 = vmatprep.subr.bf16.mxu0 0
    %674 = vmatpush2.bf16.msra.mxu0 0
    %675 = vmatprep.subr.bf16.mxu0 0
    %676 = vmatpush2.bf16.msra.mxu0 0
    %677 = vmatprep.subr.bf16.mxu0 0
    %678 = vmatpush2.bf16.msra.mxu0 0
    %679 = vmatprep.subr.bf16.mxu0 0
    %680 = vmatpush2.bf16.msra.mxu0 0
    %681 = vmatprep.subr.bf16.mxu0 0
    %682 = vmatpush2.bf16.msra.mxu0 0
    %683 = vmatprep.subr.bf16.mxu0 0
    %684 = vmatpush2.bf16.msra.mxu0 0
    %685 = vmatprep.subr.bf16.mxu0 0
    %686 = vmatpush2.bf16.msra.mxu0 0
    %687 = vmatprep.subr.bf16.mxu0 0
    %688 = vmatpush2.bf16.msra.mxu0 0
    %689 = vmatprep.mubr.bf16.mxu0 0
    %690 = vmatmul.mubr.bf16.gmra.mxu0 %v193
    %v691 = vpop.f32.mrf.mxu0
    %v692 = vadd.f32 %v652, %v691
    %v693 = vpop.f32.mrf.mxu0
    %v694 = vpop.f32.mrf.mxu0
    %v695 = vpop.f32.mrf.mxu0
    %696 = vdwg.mxu0
    %v697 = vmax.f32 %v692, 0.0
    %v698 = vpack.c.bf16 %v697, %v697
    %v699 = vld [vmem:[%s4] sm:$0xf]
    %v700 = vld [vmem:[%s4 + $0x4] sm:$0xf]
    %v701 = vld [vmem:[%s4 + $0x8] sm:$0xf]
    %v702 = vld [vmem:[%s4 + $0xc] sm:$0xf]
    %v703 = vld [vmem:[%s4 + $0x10] sm:$0xf]
    %v704 = vld [vmem:[%s4 + $0x14] sm:$0xf]
    %v705 = vld [vmem:[%s4 + $0x18] sm:$0xf]
    %v706 = vld [vmem:[%s4 + $0x1c] sm:$0xf]
    %v707 = vld [vmem:[%s4 + $0x20] sm:$0xf]
    %v708 = vld [vmem:[%s4 + $0x24] sm:$0xf]
    %v709 = vld [vmem:[%s4 + $0x28] sm:$0xf]
    %v710 = vld [vmem:[%s4 + $0x2c] sm:$0xf]
    %v711 = vld [vmem:[%s4 + $0x30] sm:$0xf]
    %v712 = vld [vmem:[%s4 + $0x34] sm:$0xf]
    %v713 = vld [vmem:[%s4 + $0x38] sm:$0xf]
    %v714 = vld [vmem:[%s4 + $0x3c] sm:$0xf]
    %v715 = vld [vmem:[%s5] sm:$0x1]
    %v717 = vlaneseq
    %v718 = vshrl.u32 %v717, 7
    %v719 = vsub.s32 0, %v718
    %v720 = vrot.slane %v715, %v719
    %v738 = vunpack.c.l.b16 %v699
    %v739 = vunpack.c.l.b16 %v700
    %v740 = vunpack.c.l.b16 %v701
    %v741 = vunpack.c.l.b16 %v702
    %v742 = vunpack.c.l.b16 %v703
    %v743 = vunpack.c.l.b16 %v704
    %v744 = vunpack.c.l.b16 %v705
    %v745 = vunpack.c.l.b16 %v706
    %v746 = vunpack.c.l.b16 %v707
    %v747 = vunpack.c.l.b16 %v708
    %v748 = vunpack.c.l.b16 %v709
    %v749 = vunpack.c.l.b16 %v710
    %v750 = vunpack.c.l.b16 %v711
    %v751 = vunpack.c.l.b16 %v712
    %v752 = vunpack.c.l.b16 %v713
    %v753 = vunpack.c.l.b16 %v714
    %v754 = vpack.c.b16 %v739, %v738
    %v755 = vpack.c.b16 %v741, %v740
    %v756 = vpack.c.b16 %v743, %v742
    %v757 = vpack.c.b16 %v745, %v744
    %v758 = vpack.c.b16 %v747, %v746
    %v759 = vpack.c.b16 %v749, %v748
    %v760 = vpack.c.b16 %v751, %v750
    %v761 = vpack.c.b16 %v753, %v752
    %770 = vmatprep.subr.bf16.mxu0 0
    %771 = vmatpush1.bf16.msra.mxu0 %v761
    %772 = vmatprep.subr.bf16.mxu0 0
    %773 = vmatpush1.bf16.msra.mxu0 %v760
    %774 = vmatprep.subr.bf16.mxu0 0
    %775 = vmatpush1.bf16.msra.mxu0 %v759
    %776 = vmatprep.subr.bf16.mxu0 0
    %777 = vmatpush1.bf16.msra.mxu0 %v758
    %778 = vmatprep.subr.bf16.mxu0 0
    %779 = vmatpush1.bf16.msra.mxu0 %v757
    %780 = vmatprep.subr.bf16.mxu0 0
    %781 = vmatpush1.bf16.msra.mxu0 %v756
    %782 = vmatprep.subr.bf16.mxu0 0
    %783 = vmatpush1.bf16.msra.mxu0 %v755
    %784 = vmatprep.subr.bf16.mxu0 0
    %785 = vmatpush1.bf16.msra.mxu0 %v754
    %786 = vmatprep.subr.bf16.mxu0 0
    %787 = vmatpush2.bf16.msra.mxu0 0
    %788 = vmatprep.subr.bf16.mxu0 0
    %789 = vmatpush2.bf16.msra.mxu0 0
    %790 = vmatprep.subr.bf16.mxu0 0
    %791 = vmatpush2.bf16.msra.mxu0 0
    %792 = vmatprep.subr.bf16.mxu0 0
    %793 = vmatpush2.bf16.msra.mxu0 0
    %794 = vmatprep.subr.bf16.mxu0 0
    %795 = vmatpush2.bf16.msra.mxu0 0
    %796 = vmatprep.subr.bf16.mxu0 0
    %797 = vmatpush2.bf16.msra.mxu0 0
    %798 = vmatprep.subr.bf16.mxu0 0
    %799 = vmatpush2.bf16.msra.mxu0 0
    %800 = vmatprep.subr.bf16.mxu0 0
    %801 = vmatpush2.bf16.msra.mxu0 0
    %802 = vmatprep.mubr.bf16.mxu0 0
    %803 = vmatmul.mubr.bf16.gmra.mxu0 %v698
    %v804 = vpop.f32.mrf.mxu0
    %v805 = vadd.f32 %v720, %v804
    %v806 = vpop.f32.mrf.mxu0
    %v807 = vpop.f32.mrf.mxu0
    %v808 = vpop.f32.mrf.mxu0
    %809 = vdwg.mxu0
    %v810 = vld [vmem:[%s1] sm:$0xff]
    %v811 = vmul.f32 %v805, 0.5
    %v812 = vmul.f32 %v811, 1.442695
    %v813 = vpow.pop %v812
    %815 = vrot.lane.b32.xlu0 %v813, 96
    %v816 = vpop.permute.xlu0 %815
    %v818 = vmul.f32 %v810, %v816
    %v819 = vadd.f32 %v805, %v818
    %v820 = vpack.c.bf16 %v819, %v819
    %v821 = vld [vmem:[%s6] sm:$0xf]
    %v822 = vld [vmem:[%s6 + $0x4] sm:$0xf]
    %v823 = vld [vmem:[%s6 + $0x8] sm:$0xf]
    %v824 = vld [vmem:[%s6 + $0xc] sm:$0xf]
    %v825 = vld [vmem:[%s7] sm:$0x1]
    %v827 = vlaneseq
    %v828 = vshrl.u32 %v827, 7
    %v829 = vsub.s32 0, %v828
    %v830 = vrot.slane %v825, %v829
    %v836 = vunpack.c.l.b16 %v821
    %v837 = vunpack.c.l.b16 %v822
    %v838 = vunpack.c.l.b16 %v823
    %v839 = vunpack.c.l.b16 %v824
    %v840 = vpack.c.b16 %v837, %v836
    %v841 = vpack.c.b16 %v839, %v838
    %vm844 = vcmask 261120
    %v846 = vsel %vm844, %v820, 0
    %848 = vmatprep.subr.bf16.mxu0 0
    %849 = vmatpush1.bf16.msra.mxu0 0
    %850 = vmatprep.subr.bf16.mxu0 0
    %851 = vmatpush1.bf16.msra.mxu0 0
    %852 = vmatprep.subr.bf16.mxu0 0
    %853 = vmatpush1.bf16.msra.mxu0 0
    %854 = vmatprep.subr.bf16.mxu0 0
    %855 = vmatpush1.bf16.msra.mxu0 0
    %856 = vmatprep.subr.bf16.mxu0 0
    %857 = vmatpush1.bf16.msra.mxu0 0
    %858 = vmatprep.subr.bf16.mxu0 0
    %859 = vmatpush1.bf16.msra.mxu0 0
    %860 = vmatprep.subr.bf16.mxu0 0
    %861 = vmatpush1.bf16.msra.mxu0 %v841
    %862 = vmatprep.subr.bf16.mxu0 0
    %863 = vmatpush1.bf16.msra.mxu0 %v840
    %864 = vmatprep.subr.bf16.mxu0 0
    %865 = vmatpush2.bf16.msra.mxu0 0
    %866 = vmatprep.subr.bf16.mxu0 0
    %867 = vmatpush2.bf16.msra.mxu0 0
    %868 = vmatprep.subr.bf16.mxu0 0
    %869 = vmatpush2.bf16.msra.mxu0 0
    %870 = vmatprep.subr.bf16.mxu0 0
    %871 = vmatpush2.bf16.msra.mxu0 0
    %872 = vmatprep.subr.bf16.mxu0 0
    %873 = vmatpush2.bf16.msra.mxu0 0
    %874 = vmatprep.subr.bf16.mxu0 0
    %875 = vmatpush2.bf16.msra.mxu0 0
    %876 = vmatprep.subr.bf16.mxu0 0
    %877 = vmatpush2.bf16.msra.mxu0 0
    %878 = vmatprep.subr.bf16.mxu0 0
    %879 = vmatpush2.bf16.msra.mxu0 0
    %880 = vmatprep.mubr.bf16.mxu0 0
    %881 = vmatmul.mubr.bf16.gmra.mxu0 %v846
    %v882 = vpop.f32.mrf.mxu0
    %v883 = vadd.f32 %v830, %v882
    %v884 = vpop.f32.mrf.mxu0
    %v885 = vpop.f32.mrf.mxu0
    %v886 = vpop.f32.mrf.mxu0
    %887 = vdwg.mxu0
    %v888 = vmax.f32 %v883, 0.0
    %v889 = vpack.c.bf16 %v888, %v888
    %v890 = vld [vmem:[#allocation2] sm:$0xff]
    %v891 = vld [vmem:[#allocation2 + $0x8] sm:$0xff]
    %v892 = vld [vmem:[#allocation2 + $0x10] sm:$0xff]
    %v893 = vld [vmem:[#allocation2 + $0x18] sm:$0xf]
    %v894 = vld [vmem:[#allocation2 + $0x1c] sm:$0xff]
    %v895 = vld [vmem:[#allocation2 + $0x24] sm:$0xff]
    %v896 = vld [vmem:[#allocation2 + $0x2c] sm:$0xff]
    %v897 = vld [vmem:[#allocation2 + $0x34] sm:$0xf]
    %v898 = vld [vmem:[#allocation2 + $0x38] sm:$0xff]
    %v899 = vld [vmem:[#allocation2 + $0x40] sm:$0xff]
    %v900 = vld [vmem:[#allocation2 + $0x48] sm:$0xff]
    %v901 = vld [vmem:[#allocation2 + $0x50] sm:$0xf]
    %v902 = vld [vmem:[#allocation2 + $0x54] sm:$0xff]
    %v903 = vld [vmem:[#allocation2 + $0x5c] sm:$0xff]
    %v904 = vld [vmem:[#allocation2 + $0x64] sm:$0xff]
    %v905 = vld [vmem:[#allocation2 + $0x6c] sm:$0xf]
    %v906 = vld [vmem:[#allocation2 + $0x70] sm:$0xff]
    %v907 = vld [vmem:[#allocation2 + $0x78] sm:$0xff]
    %v908 = vld [vmem:[#allocation2 + $0x80] sm:$0xff]
    %v909 = vld [vmem:[#allocation2 + $0x88] sm:$0xf]
    %v910 = vld [vmem:[#allocation2 + $0x8c] sm:$0xff]
    %v911 = vld [vmem:[#allocation2 + $0x94] sm:$0xff]
    %v912 = vld [vmem:[#allocation2 + $0x9c] sm:$0xff]
    %v913 = vld [vmem:[#allocation2 + $0xa4] sm:$0xf]
    %v914 = vld [vmem:[#allocation2 + $0xa8] sm:$0xff]
    %v915 = vld [vmem:[#allocation2 + $0xb0] sm:$0xff]
    %v916 = vld [vmem:[#allocation2 + $0xb8] sm:$0xff]
    %v917 = vld [vmem:[#allocation2 + $0xc0] sm:$0xf]
    %v918 = vld [vmem:[#allocation2 + $0xc4] sm:$0xff]
    %v919 = vld [vmem:[#allocation2 + $0xcc] sm:$0xff]
    %v920 = vld [vmem:[#allocation2 + $0xd4] sm:$0xff]
    %v921 = vld [vmem:[#allocation2 + $0xdc] sm:$0xf]
    %v922 = vld [vmem:[#allocation2 + $0xe0] sm:$0xff]
    %v923 = vld [vmem:[#allocation2 + $0xe8] sm:$0xff]
    %v924 = vld [vmem:[#allocation2 + $0xf0] sm:$0xff]
    %v925 = vld [vmem:[#allocation2 + $0xf8] sm:$0xf]
    %v926 = vld [vmem:[#allocation2 + $0xfc] sm:$0xff]
    %v927 = vld [vmem:[#allocation2 + $0x104] sm:$0xff]
    %v928 = vld [vmem:[#allocation2 + $0x10c] sm:$0xff]
    %v929 = vld [vmem:[#allocation2 + $0x114] sm:$0xf]
    %v930 = vld [vmem:[#allocation2 + $0x118] sm:$0xff]
    %v931 = vld [vmem:[#allocation2 + $0x120] sm:$0xff]
    %v932 = vld [vmem:[#allocation2 + $0x128] sm:$0xff]
    %v933 = vld [vmem:[#allocation2 + $0x130] sm:$0xf]
    %v934 = vld [vmem:[#allocation2 + $0x134] sm:$0xff]
    %v935 = vld [vmem:[#allocation2 + $0x13c] sm:$0xff]
    %v936 = vld [vmem:[#allocation2 + $0x144] sm:$0xff]
    %v937 = vld [vmem:[#allocation2 + $0x14c] sm:$0xf]
    %v938 = vld [vmem:[#allocation2 + $0x150] sm:$0xff]
    %v939 = vld [vmem:[#allocation2 + $0x158] sm:$0xff]
    %v940 = vld [vmem:[#allocation2 + $0x160] sm:$0xff]
    %v941 = vld [vmem:[#allocation2 + $0x168] sm:$0xf]
    %v942 = vld [vmem:[#allocation2 + $0x16c] sm:$0xff]
    %v943 = vld [vmem:[#allocation2 + $0x174] sm:$0xff]
    %v944 = vld [vmem:[#allocation2 + $0x17c] sm:$0xff]
    %v945 = vld [vmem:[#allocation2 + $0x184] sm:$0xf]
    %v946 = vld [vmem:[#allocation2 + $0x188] sm:$0xff]
    %v947 = vld [vmem:[#allocation2 + $0x190] sm:$0xff]
    %v948 = vld [vmem:[#allocation2 + $0x198] sm:$0xff]
    %v949 = vld [vmem:[#allocation2 + $0x1a0] sm:$0xf]
    %v950 = vld [vmem:[#allocation2 + $0x1a4] sm:$0xff]
    %v951 = vld [vmem:[#allocation2 + $0x1ac] sm:$0xff]
    %v952 = vld [vmem:[#allocation2 + $0x1b4] sm:$0xff]
    %v953 = vld [vmem:[#allocation2 + $0x1bc] sm:$0xf]
    %v954 = vld [vmem:[%s9] sm:$0xff]
    %v956 = vlaneseq
    %v957 = vshrl.u32 %v956, 7
    %v958 = vsub.s32 0, %v957
    %v959 = vrot.slane %v954, %v958
    %v960 = vlaneseq
    %v961 = vshrl.u32 %v960, 7
    %v962 = vsub.s32 1, %v961
    %v963 = vrot.slane %v954, %v962
    %v964 = vlaneseq
    %v965 = vshrl.u32 %v964, 7
    %v966 = vsub.s32 2, %v965
    %v967 = vrot.slane %v954, %v966
    %v968 = vlaneseq
    %v969 = vshrl.u32 %v968, 7
    %v970 = vsub.s32 3, %v969
    %v971 = vrot.slane %v954, %v970
    %v972 = vlaneseq
    %v973 = vshrl.u32 %v972, 7
    %v974 = vsub.s32 4, %v973
    %v975 = vrot.slane %v954, %v974
    %v976 = vlaneseq
    %v977 = vshrl.u32 %v976, 7
    %v978 = vsub.s32 5, %v977
    %v979 = vrot.slane %v954, %v978
    %v980 = vlaneseq
    %v981 = vshrl.u32 %v980, 7
    %v982 = vsub.s32 6, %v981
    %v983 = vrot.slane %v954, %v982
    %v1055 = vunpack.c.l.b16 %v890
    %v1056 = vunpack.c.h.b16 %v890
    %v1057 = vunpack.c.l.b16 %v891
    %v1058 = vunpack.c.h.b16 %v891
    %v1059 = vunpack.c.l.b16 %v892
    %v1060 = vunpack.c.h.b16 %v892
    %v1061 = vunpack.c.l.b16 %v893
    %v1062 = vunpack.c.l.b16 %v894
    %v1063 = vunpack.c.h.b16 %v894
    %v1064 = vunpack.c.l.b16 %v895
    %v1065 = vunpack.c.h.b16 %v895
    %v1066 = vunpack.c.l.b16 %v896
    %v1067 = vunpack.c.h.b16 %v896
    %v1068 = vunpack.c.l.b16 %v897
    %v1069 = vunpack.c.l.b16 %v898
    %v1070 = vunpack.c.h.b16 %v898
    %v1071 = vunpack.c.l.b16 %v899
    %v1072 = vunpack.c.h.b16 %v899
    %v1073 = vunpack.c.l.b16 %v900
    %v1074 = vunpack.c.h.b16 %v900
    %v1075 = vunpack.c.l.b16 %v901
    %v1076 = vunpack.c.l.b16 %v902
    %v1077 = vunpack.c.h.b16 %v902
    %v1078 = vunpack.c.l.b16 %v903
    %v1079 = vunpack.c.h.b16 %v903
    %v1080 = vunpack.c.l.b16 %v904
    %v1081 = vunpack.c.h.b16 %v904
    %v1082 = vunpack.c.l.b16 %v905
    %v1083 = vunpack.c.l.b16 %v906
    %v1084 = vunpack.c.h.b16 %v906
    %v1085 = vunpack.c.l.b16 %v907
    %v1086 = vunpack.c.h.b16 %v907
    %v1087 = vunpack.c.l.b16 %v908
    %v1088 = vunpack.c.h.b16 %v908
    %v1089 = vunpack.c.l.b16 %v909
    %v1090 = vunpack.c.l.b16 %v910
    %v1091 = vunpack.c.h.b16 %v910
    %v1092 = vunpack.c.l.b16 %v911
    %v1093 = vunpack.c.h.b16 %v911
    %v1094 = vunpack.c.l.b16 %v912
    %v1095 = vunpack.c.h.b16 %v912
    %v1096 = vunpack.c.l.b16 %v913
    %v1097 = vunpack.c.l.b16 %v914
    %v1098 = vunpack.c.h.b16 %v914
    %v1099 = vunpack.c.l.b16 %v915
    %v1100 = vunpack.c.h.b16 %v915
    %v1101 = vunpack.c.l.b16 %v916
    %v1102 = vunpack.c.h.b16 %v916
    %v1103 = vunpack.c.l.b16 %v917
    %v1104 = vunpack.c.l.b16 %v918
    %v1105 = vunpack.c.h.b16 %v918
    %v1106 = vunpack.c.l.b16 %v919
    %v1107 = vunpack.c.h.b16 %v919
    %v1108 = vunpack.c.l.b16 %v920
    %v1109 = vunpack.c.h.b16 %v920
    %v1110 = vunpack.c.l.b16 %v921
    %v1111 = vunpack.c.l.b16 %v922
    %v1112 = vunpack.c.h.b16 %v922
    %v1113 = vunpack.c.l.b16 %v923
    %v1114 = vunpack.c.h.b16 %v923
    %v1115 = vunpack.c.l.b16 %v924
    %v1116 = vunpack.c.h.b16 %v924
    %v1117 = vunpack.c.l.b16 %v925
    %v1118 = vunpack.c.l.b16 %v926
    %v1119 = vunpack.c.h.b16 %v926
    %v1120 = vunpack.c.l.b16 %v927
    %v1121 = vunpack.c.h.b16 %v927
    %v1122 = vunpack.c.l.b16 %v928
    %v1123 = vunpack.c.h.b16 %v928
    %v1124 = vunpack.c.l.b16 %v929
    %v1125 = vunpack.c.l.b16 %v930
    %v1126 = vunpack.c.h.b16 %v930
    %v1127 = vunpack.c.l.b16 %v931
    %v1128 = vunpack.c.h.b16 %v931
    %v1129 = vunpack.c.l.b16 %v932
    %v1130 = vunpack.c.h.b16 %v932
    %v1131 = vunpack.c.l.b16 %v933
    %v1132 = vunpack.c.l.b16 %v934
    %v1133 = vunpack.c.h.b16 %v934
    %v1134 = vunpack.c.l.b16 %v935
    %v1135 = vunpack.c.h.b16 %v935
    %v1136 = vunpack.c.l.b16 %v936
    %v1137 = vunpack.c.h.b16 %v936
    %v1138 = vunpack.c.l.b16 %v937
    %v1139 = vunpack.c.l.b16 %v938
    %v1140 = vunpack.c.h.b16 %v938
    %v1141 = vunpack.c.l.b16 %v939
    %v1142 = vunpack.c.h.b16 %v939
    %v1143 = vunpack.c.l.b16 %v940
    %v1144 = vunpack.c.h.b16 %v940
    %v1145 = vunpack.c.l.b16 %v941
    %v1146 = vunpack.c.l.b16 %v942
    %v1147 = vunpack.c.h.b16 %v942
    %v1148 = vunpack.c.l.b16 %v943
    %v1149 = vunpack.c.h.b16 %v943
    %v1150 = vunpack.c.l.b16 %v944
    %v1151 = vunpack.c.h.b16 %v944
    %v1152 = vunpack.c.l.b16 %v945
    %v1153 = vunpack.c.l.b16 %v946
    %v1154 = vunpack.c.h.b16 %v946
    %v1155 = vunpack.c.l.b16 %v947
    %v1156 = vunpack.c.h.b16 %v947
    %v1157 = vunpack.c.l.b16 %v948
    %v1158 = vunpack.c.h.b16 %v948
    %v1159 = vunpack.c.l.b16 %v949
    %v1160 = vunpack.c.l.b16 %v950
    %v1161 = vunpack.c.h.b16 %v950
    %v1162 = vunpack.c.l.b16 %v951
    %v1163 = vunpack.c.h.b16 %v951
    %v1164 = vunpack.c.l.b16 %v952
    %v1165 = vunpack.c.h.b16 %v952
    %v1166 = vunpack.c.l.b16 %v953
    %v1167 = vpack.c.b16 %v1062, %v1055
    %v1168 = vpack.c.b16 %v1063, %v1056
    %v1169 = vpack.c.b16 %v1064, %v1057
    %v1170 = vpack.c.b16 %v1065, %v1058
    %v1171 = vpack.c.b16 %v1066, %v1059
    %v1172 = vpack.c.b16 %v1067, %v1060
    %v1173 = vpack.c.b16 %v1068, %v1061
    %v1174 = vpack.c.b16 %v1076, %v1069
    %v1175 = vpack.c.b16 %v1077, %v1070
    %v1176 = vpack.c.b16 %v1078, %v1071
    %v1177 = vpack.c.b16 %v1079, %v1072
    %v1178 = vpack.c.b16 %v1080, %v1073
    %v1179 = vpack.c.b16 %v1081, %v1074
    %v1180 = vpack.c.b16 %v1082, %v1075
    %v1181 = vpack.c.b16 %v1090, %v1083
    %v1182 = vpack.c.b16 %v1091, %v1084
    %v1183 = vpack.c.b16 %v1092, %v1085
    %v1184 = vpack.c.b16 %v1093, %v1086
    %v1185 = vpack.c.b16 %v1094, %v1087
    %v1186 = vpack.c.b16 %v1095, %v1088
    %v1187 = vpack.c.b16 %v1096, %v1089
    %v1188 = vpack.c.b16 %v1104, %v1097
    %v1189 = vpack.c.b16 %v1105, %v1098
    %v1190 = vpack.c.b16 %v1106, %v1099
    %v1191 = vpack.c.b16 %v1107, %v1100
    %v1192 = vpack.c.b16 %v1108, %v1101
    %v1193 = vpack.c.b16 %v1109, %v1102
    %v1194 = vpack.c.b16 %v1110, %v1103
    %v1195 = vpack.c.b16 %v1118, %v1111
    %v1196 = vpack.c.b16 %v1119, %v1112
    %v1197 = vpack.c.b16 %v1120, %v1113
    %v1198 = vpack.c.b16 %v1121, %v1114
    %v1199 = vpack.c.b16 %v1122, %v1115
    %v1200 = vpack.c.b16 %v1123, %v1116
    %v1201 = vpack.c.b16 %v1124, %v1117
    %v1202 = vpack.c.b16 %v1132, %v1125
    %v1203 = vpack.c.b16 %v1133, %v1126
    %v1204 = vpack.c.b16 %v1134, %v1127
    %v1205 = vpack.c.b16 %v1135, %v1128
    %v1206 = vpack.c.b16 %v1136, %v1129
    %v1207 = vpack.c.b16 %v1137, %v1130
    %v1208 = vpack.c.b16 %v1138, %v1131
    %v1209 = vpack.c.b16 %v1146, %v1139
    %v1210 = vpack.c.b16 %v1147, %v1140
    %v1211 = vpack.c.b16 %v1148, %v1141
    %v1212 = vpack.c.b16 %v1149, %v1142
    %v1213 = vpack.c.b16 %v1150, %v1143
    %v1214 = vpack.c.b16 %v1151, %v1144
    %v1215 = vpack.c.b16 %v1152, %v1145
    %v1216 = vpack.c.b16 %v1160, %v1153
    %v1217 = vpack.c.b16 %v1161, %v1154
    %v1218 = vpack.c.b16 %v1162, %v1155
    %v1219 = vpack.c.b16 %v1163, %v1156
    %v1220 = vpack.c.b16 %v1164, %v1157
    %v1221 = vpack.c.b16 %v1165, %v1158
    %v1222 = vpack.c.b16 %v1166, %v1159
    %1279 = vmatprep.subr.bf16.mxu0 %v1217
    %1280 = vmatpush1.bf16.msra.mxu0 %v1216
    %1281 = vmatprep.subr.bf16.mxu0 %v1210
    %1282 = vmatpush1.bf16.msra.mxu0 %v1209
    %1283 = vmatprep.subr.bf16.mxu0 %v1203
    %1284 = vmatpush1.bf16.msra.mxu0 %v1202
    %1285 = vmatprep.subr.bf16.mxu0 %v1196
    %1286 = vmatpush1.bf16.msra.mxu0 %v1195
    %1287 = vmatprep.subr.bf16.mxu0 %v1189
    %1288 = vmatpush1.bf16.msra.mxu0 %v1188
    %1289 = vmatprep.subr.bf16.mxu0 %v1182
    %1290 = vmatpush1.bf16.msra.mxu0 %v1181
    %1291 = vmatprep.subr.bf16.mxu0 %v1175
    %1292 = vmatpush1.bf16.msra.mxu0 %v1174
    %1293 = vmatprep.subr.bf16.mxu0 %v1168
    %1294 = vmatpush1.bf16.msra.mxu0 %v1167
    %1295 = vmatprep.subr.bf16.mxu0 0
    %1296 = vmatpush2.bf16.msra.mxu0 0
    %1297 = vmatprep.subr.bf16.mxu0 0
    %1298 = vmatpush2.bf16.msra.mxu0 0
    %1299 = vmatprep.subr.bf16.mxu0 0
    %1300 = vmatpush2.bf16.msra.mxu0 0
    %1301 = vmatprep.subr.bf16.mxu0 0
    %1302 = vmatpush2.bf16.msra.mxu0 0
    %1303 = vmatprep.subr.bf16.mxu0 0
    %1304 = vmatpush2.bf16.msra.mxu0 0
    %1305 = vmatprep.subr.bf16.mxu0 0
    %1306 = vmatpush2.bf16.msra.mxu0 0
    %1307 = vmatprep.subr.bf16.mxu0 0
    %1308 = vmatpush2.bf16.msra.mxu0 0
    %1309 = vmatprep.subr.bf16.mxu0 0
    %1310 = vmatpush2.bf16.msra.mxu0 0
    %1311 = vmatprep.mubr.bf16.mxu0 0
    %1312 = vmatmul.mubr.bf16.gmra.mxu0 %v889
    %v1313 = vpop.f32.mrf.mxu0
    %v1314 = vadd.f32 %v959, %v1313
    %v1315 = vpop.f32.mrf.mxu0
    %v1316 = vadd.f32 %v963, %v1315
    %v1317 = vpop.f32.mrf.mxu0
    %v1318 = vpop.f32.mrf.mxu0
    %1319 = vdwg.mxu0
    %1320 = vmatprep.subr.bf16.mxu0 %v1219
    %1321 = vmatpush1.bf16.msra.mxu0 %v1218
    %1322 = vmatprep.subr.bf16.mxu0 %v1212
    %1323 = vmatpush1.bf16.msra.mxu0 %v1211
    %1324 = vmatprep.subr.bf16.mxu0 %v1205
    %1325 = vmatpush1.bf16.msra.mxu0 %v1204
    %1326 = vmatprep.subr.bf16.mxu0 %v1198
    %1327 = vmatpush1.bf16.msra.mxu0 %v1197
    %1328 = vmatprep.subr.bf16.mxu0 %v1191
    %1329 = vmatpush1.bf16.msra.mxu0 %v1190
    %1330 = vmatprep.subr.bf16.mxu0 %v1184
    %1331 = vmatpush1.bf16.msra.mxu0 %v1183
    %1332 = vmatprep.subr.bf16.mxu0 %v1177
    %1333 = vmatpush1.bf16.msra.mxu0 %v1176
    %1334 = vmatprep.subr.bf16.mxu0 %v1170
    %1335 = vmatpush1.bf16.msra.mxu0 %v1169
    %1336 = vmatprep.subr.bf16.mxu0 0
    %1337 = vmatpush2.bf16.msra.mxu0 0
    %1338 = vmatprep.subr.bf16.mxu0 0
    %1339 = vmatpush2.bf16.msra.mxu0 0
    %1340 = vmatprep.subr.bf16.mxu0 0
    %1341 = vmatpush2.bf16.msra.mxu0 0
    %1342 = vmatprep.subr.bf16.mxu0 0
    %1343 = vmatpush2.bf16.msra.mxu0 0
    %1344 = vmatprep.subr.bf16.mxu0 0
    %1345 = vmatpush2.bf16.msra.mxu0 0
    %1346 = vmatprep.subr.bf16.mxu0 0
    %1347 = vmatpush2.bf16.msra.mxu0 0
    %1348 = vmatprep.subr.bf16.mxu0 0
    %1349 = vmatpush2.bf16.msra.mxu0 0
    %1350 = vmatprep.subr.bf16.mxu0 0
    %1351 = vmatpush2.bf16.msra.mxu0 0
    %1352 = vmatprep.mubr.bf16.mxu0 0
    %1353 = vmatmul.mubr.bf16.gmra.mxu0 %v889
    %v1354 = vpop.f32.mrf.mxu0
    %v1355 = vadd.f32 %v967, %v1354
    %v1356 = vpop.f32.mrf.mxu0
    %v1357 = vadd.f32 %v971, %v1356
    %v1358 = vpop.f32.mrf.mxu0
    %v1359 = vpop.f32.mrf.mxu0
    %1360 = vdwg.mxu0
    %1361 = vmatprep.subr.bf16.mxu0 %v1221
    %1362 = vmatpush1.bf16.msra.mxu0 %v1220
    %1363 = vmatprep.subr.bf16.mxu0 %v1214
    %1364 = vmatpush1.bf16.msra.mxu0 %v1213
    %1365 = vmatprep.subr.bf16.mxu0 %v1207
    %1366 = vmatpush1.bf16.msra.mxu0 %v1206
    %1367 = vmatprep.subr.bf16.mxu0 %v1200
    %1368 = vmatpush1.bf16.msra.mxu0 %v1199
    %1369 = vmatprep.subr.bf16.mxu0 %v1193
    %1370 = vmatpush1.bf16.msra.mxu0 %v1192
    %1371 = vmatprep.subr.bf16.mxu0 %v1186
    %1372 = vmatpush1.bf16.msra.mxu0 %v1185
    %1373 = vmatprep.subr.bf16.mxu0 %v1179
    %1374 = vmatpush1.bf16.msra.mxu0 %v1178
    %1375 = vmatprep.subr.bf16.mxu0 %v1172
    %1376 = vmatpush1.bf16.msra.mxu0 %v1171
    %1377 = vmatprep.subr.bf16.mxu0 0
    %1378 = vmatpush2.bf16.msra.mxu0 0
    %1379 = vmatprep.subr.bf16.mxu0 0
    %1380 = vmatpush2.bf16.msra.mxu0 0
    %1381 = vmatprep.subr.bf16.mxu0 0
    %1382 = vmatpush2.bf16.msra.mxu0 0
    %1383 = vmatprep.subr.bf16.mxu0 0
    %1384 = vmatpush2.bf16.msra.mxu0 0
    %1385 = vmatprep.subr.bf16.mxu0 0
    %1386 = vmatpush2.bf16.msra.mxu0 0
    %1387 = vmatprep.subr.bf16.mxu0 0
    %1388 = vmatpush2.bf16.msra.mxu0 0
    %1389 = vmatprep.subr.bf16.mxu0 0
    %1390 = vmatpush2.bf16.msra.mxu0 0
    %1391 = vmatprep.subr.bf16.mxu0 0
    %1392 = vmatpush2.bf16.msra.mxu0 0
    %1393 = vmatprep.mubr.bf16.mxu0 0
    %1394 = vmatmul.mubr.bf16.gmra.mxu0 %v889
    %v1395 = vpop.f32.mrf.mxu0
    %v1396 = vadd.f32 %v975, %v1395
    %v1397 = vpop.f32.mrf.mxu0
    %v1398 = vadd.f32 %v979, %v1397
    %v1399 = vpop.f32.mrf.mxu0
    %v1400 = vpop.f32.mrf.mxu0
    %1401 = vdwg.mxu0
    %1402 = vmatprep.subr.bf16.mxu0 0
    %1403 = vmatpush1.bf16.msra.mxu0 %v1222
    %1404 = vmatprep.subr.bf16.mxu0 0
    %1405 = vmatpush1.bf16.msra.mxu0 %v1215
    %1406 = vmatprep.subr.bf16.mxu0 0
    %1407 = vmatpush1.bf16.msra.mxu0 %v1208
    %1408 = vmatprep.subr.bf16.mxu0 0
    %1409 = vmatpush1.bf16.msra.mxu0 %v1201
    %1410 = vmatprep.subr.bf16.mxu0 0
    %1411 = vmatpush1.bf16.msra.mxu0 %v1194
    %1412 = vmatprep.subr.bf16.mxu0 0
    %1413 = vmatpush1.bf16.msra.mxu0 %v1187
    %1414 = vmatprep.subr.bf16.mxu0 0
    %1415 = vmatpush1.bf16.msra.mxu0 %v1180
    %1416 = vmatprep.subr.bf16.mxu0 0
    %1417 = vmatpush1.bf16.msra.mxu0 %v1173
    %1418 = vmatprep.subr.bf16.mxu0 0
    %1419 = vmatpush2.bf16.msra.mxu0 0
    %1420 = vmatprep.subr.bf16.mxu0 0
    %1421 = vmatpush2.bf16.msra.mxu0 0
    %1422 = vmatprep.subr.bf16.mxu0 0
    %1423 = vmatpush2.bf16.msra.mxu0 0
    %1424 = vmatprep.subr.bf16.mxu0 0
    %1425 = vmatpush2.bf16.msra.mxu0 0
    %1426 = vmatprep.subr.bf16.mxu0 0
    %1427 = vmatpush2.bf16.msra.mxu0 0
    %1428 = vmatprep.subr.bf16.mxu0 0
    %1429 = vmatpush2.bf16.msra.mxu0 0
    %1430 = vmatprep.subr.bf16.mxu0 0
    %1431 = vmatpush2.bf16.msra.mxu0 0
    %1432 = vmatprep.subr.bf16.mxu0 0
    %1433 = vmatpush2.bf16.msra.mxu0 0
    %1434 = vmatprep.mubr.bf16.mxu0 0
    %1435 = vmatmul.mubr.bf16.gmra.mxu0 %v889
    %v1436 = vpop.f32.mrf.mxu0
    %v1437 = vadd.f32 %v983, %v1436
    %v1438 = vpop.f32.mrf.mxu0
    %v1439 = vpop.f32.mrf.mxu0
    %v1440 = vpop.f32.mrf.mxu0
    %1441 = vdwg.mxu0
    %v1442 = vxor.u32 %v1314, 2147483648
    %v1443 = vxor.u32 %v1316, 2147483648
    %v1444 = vxor.u32 %v1355, 2147483648
    %v1445 = vxor.u32 %v1357, 2147483648
    %v1446 = vxor.u32 %v1396, 2147483648
    %v1447 = vxor.u32 %v1398, 2147483648
    %v1448 = vxor.u32 %v1437, 2147483648
    %v1449 = vmul.f32 %v1442, 1.442695
    %v1450 = vpow.pop %v1449
    %v1451 = vmul.f32 %v1443, 1.442695
    %v1452 = vpow.pop %v1451
    %v1453 = vmul.f32 %v1444, 1.442695
    %v1454 = vpow.pop %v1453
    %v1455 = vmul.f32 %v1445, 1.442695
    %v1456 = vpow.pop %v1455
    %v1457 = vmul.f32 %v1446, 1.442695
    %v1458 = vpow.pop %v1457
    %v1459 = vmul.f32 %v1447, 1.442695
    %v1460 = vpow.pop %v1459
    %v1461 = vmul.f32 %v1448, 1.442695
    %v1462 = vpow.pop %v1461
    %v1463 = vadd.f32 %v1450, 1.0
    %v1464 = vadd.f32 %v1452, 1.0
    %v1465 = vadd.f32 %v1454, 1.0
    %v1466 = vadd.f32 %v1456, 1.0
    %v1467 = vadd.f32 %v1458, 1.0
    %v1468 = vadd.f32 %v1460, 1.0
    %v1469 = vadd.f32 %v1462, 1.0
    %v1470 = vrcp.pop %v1463
    %v1471 = vmul.f32 1.0, %v1470
    %v1472 = vrcp.pop %v1464
    %v1473 = vmul.f32 1.0, %v1472
    %v1474 = vrcp.pop %v1465
    %v1475 = vmul.f32 1.0, %v1474
    %v1476 = vrcp.pop %v1466
    %v1477 = vmul.f32 1.0, %v1476
    %v1478 = vrcp.pop %v1467
    %v1479 = vmul.f32 1.0, %v1478
    %v1480 = vrcp.pop %v1468
    %v1481 = vmul.f32 1.0, %v1480
    %v1482 = vrcp.pop %v1469
    %v1483 = vmul.f32 1.0, %v1482
    %1484 = vst [vmem:[#allocation5] sm:$0xff] %v1471
    %1485 = vst [vmem:[#allocation5 + $0x8] sm:$0xff] %v1473
    %1486 = vst [vmem:[#allocation5 + $0x10] sm:$0xff] %v1475
    %1487 = vst [vmem:[#allocation5 + $0x18] sm:$0xff] %v1477
    %1488 = vst [vmem:[#allocation5 + $0x20] sm:$0xff] %v1479
    %1489 = vst [vmem:[#allocation5 + $0x28] sm:$0xff] %v1481
    %1490 = vst [vmem:[#allocation5 + $0x30] sm:$0xff] %v1483
    %vm1491 = vcmask 523264
    %1492 = vst.msk [vmem:[%s11] sm:$0xff] %vm1491, %v805
    // Predicated region
    $region46: #{vae_forward.1} parent=1 // pred_check
      _
    $region47: #{vae_forward.1} parent=1 // pred_check_branch
      %1494 = sbr.rel (0) target = $region49
    $region48: #{vae_forward.1} parent=1 // pred_region
      %s1496 = ssub.s32 896, 896
      %1497 = vsyncadd [#allocation4], %s1496
      %s1499 = sshll.u32 [#allocation5], 4
      %s1500 = int_to_ptr.vmem [resolvable:$true] %s1499
      %1502 = dma.vmem_to_hbm [thread:$0]  %s1500, 896, %s10, [#allocation4]
    $region49: #{vae_forward.1} parent=1 // pred_fallthru
      _
    // Predicated region
    $region50: #{vae_forward.1} parent=1 // pred_check
      _
    $region51: #{vae_forward.1} parent=1 // pred_check_branch
      %1504 = sbr.rel (0) target = $region53
    $region52: #{vae_forward.1} parent=1 // pred_region
      _
    $region53: #{vae_forward.1} parent=1 // pred_fallthru
      _
    // Predicated region
    $region54: #{vae_forward.1} parent=1 // pred_check
      _
    $region55: #{vae_forward.1} parent=1 // pred_check_branch
      %1506 = sbr.rel (0) target = $region57
    $region56: #{vae_forward.1} parent=1 // pred_region
      %1507 = dma.done [#allocation4], 896
    $region57: #{vae_forward.1} parent=1 // pred_fallthru
      _
    // Predicated region
    $region58: #{vae_forward.1} parent=1 // pred_check
      _
    $region59: #{vae_forward.1} parent=1 // pred_check_branch
      %1509 = sbr.rel (0) target = $region61
    $region60: #{vae_forward.1} parent=1 // pred_region
      _
    $region61: #{vae_forward.1} parent=1 // pred_fallthru
      _
    %1510 = vsyncpa [#allocation3], 1
    %1511 = vsyncpa [#allocation4], 1

</llo_original>
